<compile_context>
chip_gen: v7x
topology: tpu7x:2x2x1
jax: 0.10.0
libtpu: 0.0.40
codegen_flags: <defaults>
</compile_context>

<pallas_src>
import functools

import jax
import jax.numpy as jnp
from jax.experimental import pallas as pl
from jax.experimental.pallas import tpu as pltpu


def _downsampling_kernel(*refs, cin, cout, ho, wo, bt, compute_extra):
    """One grid step = `bt` batch elements.

    s_ref block is (bt*4, Hp, Wp, Cin): row 4*b+g holds channel-group g=2r+s of
    the space-to-depth padded input for batch element b.  Tap (kh, kw) of the
    3x3 stride-2 window is the unit-stride slice
        s_ref[4*b + 2*(kh%2)+(kw%2), kh//2:kh//2+ho, kw//2:kw//2+wo, :].
    Outputs are stored lane-dense as (bt, cout, ho*wo).
    """
    f32 = jnp.float32
    howo = ho * wo
    if compute_extra:
        (s_ref, w12_ref, shift12_ref, w11_ref, shift11_ref,
         gmean_ref, w13_ref, b13_ref, out12_ref, out_ref) = refs
    else:
        s_ref, w12_ref, shift12_ref, out12_ref = refs

    # Hoist the small resident operands out of the (unrolled) batch loop so the
    # loads are not re-issued per iteration.
    w_taps = [w12_ref[k] for k in range(9)]          # 9 x (cout, cin)
    shift12 = shift12_ref[...]                       # (cout, 1) f32
    if compute_extra:
        w11 = w11_ref[...]                           # (cout, cin) f32, s11/9 folded
        shift11 = shift11_ref[...]                   # (cout, 1) f32
        w13 = w13_ref[...]                           # (cout, cin) f32
        b13 = b13_ref[...]                           # (cout, 1) f32

    # TODO(synk): for very large batch tiles switch this unrolled Python loop to
    # lax.fori_loop to bound IR size (bt is capped by max_batch_tile in wrapper).
    for b in range(bt):
        acc = jnp.zeros((cout, howo), f32)           # f32 MXU accumulator
        tsum = jnp.zeros((howo, cin), f32) if compute_extra else None
        for kh in range(3):
            for kw in range(3):
                g = 2 * (kh % 2) + (kw % 2)
                tap = s_ref[4 * b + g,
                            kh // 2:kh // 2 + ho,
                            kw // 2:kw // 2 + wo, :]          # (ho, wo, cin)
                tap2d = tap.reshape(howo, cin)
                # NT dot -> (cout, howo): channels on sublanes, pixels on lanes.
                acc = acc + jax.lax.dot_general(
                    w_taps[3 * kh + kw], tap2d,
                    dimension_numbers=(((1,), (1,)), ((), ())),
                    preferred_element_type=f32)
                if compute_extra:
                    tsum = tsum + tap2d.astype(f32)
        out12_b = acc + shift12                       # folded conv bias + BN shift
        out12_ref[b] = out12_b.astype(out12_ref.dtype)

        if compute_extra:
            # block11 reuses the nine taps: AvgPool3x3 at the stride-2 sites is
            # tsum/9, and the 1/9 (and BN scale) is already folded into w11.
            out11_b = jax.lax.dot_general(
                w11, tsum,
                dimension_numbers=(((1,), (1,)), ((), ())),
                preferred_element_type=f32) + shift11
            out1_b = out11_b + out12_b                          # (cout, howo)
            gm = gmean_ref[b].astype(f32)                       # (1, cin)
            out2_b = jax.nn.sigmoid(
                jnp.sum(w13 * gm, axis=1, keepdims=True) + b13)  # (cout, 1)
            out_ref[b] = (out1_b * out2_b).astype(out_ref.dtype)


def _pick_batch_tile(batch, per_batch_bytes, *, target_bytes, max_tile):
    """Divisor of `batch` whose per-step footprint stays near `target_bytes`.

    Never returns a VMEM-busting whole-batch block (per-step size is bounded by
    the budget / max_tile), and prefers >=2 (ideally even) grid steps so v7x's
    two TensorCores can both be given work.
    """
    cap = int(max(1, min(max_tile, target_bytes // max(per_batch_bytes, 1), batch)))
    divs = [d for d in range(1, batch + 1) if batch % d == 0 and d <= cap]
    best = max(divs)                                  # divisor 1 always qualifies
    if batch // best == 1 and batch > 1:
        smaller = [d for d in divs if batch // d >= 2]
        if smaller:
            best = max(smaller)
    else:
        even = [d for d in divs if (batch // d) % 2 == 0 and 2 * d >= best]
        if even:
            best = max(even)
    return best


def downsampling_forward(x_nchw, params, *, compute_extra=False, out_format="NCHW",
                         compute_dtype=jnp.bfloat16, batch_tile=None,
                         target_block_bytes=2 << 20, max_batch_tile=32,
                         s_buffer_count=None, vmem_limit_bytes=None):
    """Forward of `downsamping`.

    Returns out12 (what the PyTorch forward actually returns; `nn.SiLU(out)`
    in the original code only constructs a module).  With compute_extra=True
    also returns (out11 + out12) * sigmoid(block13(gap(x))).
    """
    (w11, b11, g11, bt11, rm11, rv11,
     w12, b12, g12, bt12, rm12, rv12,
     w13, b13) = params
    eps = 1e-5
    f32 = jnp.float32

    B, Cin, H, W = x_nchw.shape
    Cout = w12.shape[0]
    Ho, Wo = (H + 1) // 2, (W + 1) // 2          # conv3x3 s2 p1 output size
    Hp, Wp = Ho + 1, Wo + 1                      # space-to-depth padded extents
    howo = Ho * Wo

    # ---- layout glue (one XLA fusion, ~input-sized, bf16): ----
    # S[(b*4 + 2r+s), p, q, c] = xpad[b, 2p+r, 2q+s, c], so every stride-2 tap
    # becomes a unit-stride slice in the kernel (no im2col slab in HBM).
    xh = jnp.transpose(x_nchw, (0, 2, 3, 1)).astype(compute_dtype)
    xpad = jnp.pad(xh, ((0, 0), (1, 2 * Hp - H - 1), (1, 2 * Wp - W - 1), (0, 0)))
    s = xpad.reshape(B, Hp, 2, Wp, 2, Cin).transpose(0, 2, 4, 1, 3, 5)
    s = s.reshape(B * 4, Hp, Wp, Cin)
    # TODO(synk): fully-fused variant would read the raw NCHW input with
    # memory_space=pl.ANY + manual DMA and do pad/space-to-depth in-kernel,
    # removing this remaining ~input-sized HBM write+read as well.

    # ---- fold conv bias + inference BatchNorm (+ 1/9 avg-pool) into params ----
    s12 = g12 / jnp.sqrt(rv12 + eps)
    t12 = (b12 - rm12) * s12 + bt12
    w12f = w12.astype(f32) * s12[:, None, None, None]            # (Cout,Cin,3,3)
    w12taps = jnp.transpose(w12f, (2, 3, 0, 1)).reshape(9, Cout, Cin)
    w12taps = w12taps.astype(compute_dtype)
    shift12 = t12.astype(f32).reshape(Cout, 1)

    # ---- batch tiling from a per-step byte budget ----
    itemsize = jnp.dtype(compute_dtype).itemsize
    per_batch_bytes = 4 * Hp * Wp * Cin * itemsize + Cout * howo * 4
    if compute_extra:
        per_batch_bytes += Cout * howo * 4
    if batch_tile is None:
        batch_tile = _pick_batch_tile(B, per_batch_bytes,
                                      target_bytes=target_block_bytes,
                                      max_tile=max_batch_tile)
    assert B % batch_tile == 0, (B, batch_tile)
    nb = B // batch_tile
    # TODO(synk): if a single image's S block ever exceeds the VMEM budget, add a
    # spatial (row-tile) grid axis with a one-row halo instead of batch tiling.

    kernel = functools.partial(_downsampling_kernel, cin=Cin, cout=Cout,
                               ho=Ho, wo=Wo, bt=batch_tile,
                               compute_extra=compute_extra)

    s_spec_kwargs = {}
    if s_buffer_count is not None:     # e.g. 3 on v7x if the DMA becomes exposed
        s_spec_kwargs["pipeline_mode"] = pl.Buffered(s_buffer_count)
    in_specs = [
        pl.BlockSpec((batch_tile * 4, Hp, Wp, Cin), lambda b: (b, 0, 0, 0),
                     **s_spec_kwargs),
        pl.BlockSpec((9, Cout, Cin), lambda b: (0, 0, 0)),
        pl.BlockSpec((Cout, 1), lambda b: (0, 0)),
    ]
    inputs = [s, w12taps, shift12]
    out_shape = [jax.ShapeDtypeStruct((B, Cout, howo), f32)]
    out_specs = [pl.BlockSpec((batch_tile, Cout, howo), lambda b: (b, 0, 0))]

    if compute_extra:
        s11 = g11 / jnp.sqrt(rv11 + eps)
        t11 = (b11 - rm11) * s11 + bt11
        w11f = w11[:, :, 0, 0].astype(f32) * (s11 / 9.0)[:, None]   # (Cout, Cin)
        shift11 = t11.astype(f32).reshape(Cout, 1)
        w13t = w13[:, :, 0, 0].astype(f32)                          # (Cout, Cin)
        b13c = b13.astype(f32).reshape(Cout, 1)
        gmean3 = jnp.mean(x_nchw.astype(f32), axis=(2, 3)).reshape(B, 1, Cin)
        in_specs += [
            pl.BlockSpec((Cout, Cin), lambda b: (0, 0)),
            pl.BlockSpec((Cout, 1), lambda b: (0, 0)),
            pl.BlockSpec((batch_tile, 1, Cin), lambda b: (b, 0, 0)),
            pl.BlockSpec((Cout, Cin), lambda b: (0, 0)),
            pl.BlockSpec((Cout, 1), lambda b: (0, 0)),
        ]
        inputs += [w11f, shift11, gmean3, w13t, b13c]
        out_shape.append(jax.ShapeDtypeStruct((B, Cout, howo), f32))
        out_specs.append(pl.BlockSpec((batch_tile, Cout, howo), lambda b: (b, 0, 0)))

    outs = pl.pallas_call(
        kernel,
        out_shape=tuple(out_shape),
        grid_spec=pltpu.PrefetchScalarGridSpec(
            num_scalar_prefetch=0,
            grid=(nb,),
            in_specs=in_specs,
            out_specs=out_specs,
        ),
        compiler_params=pltpu.CompilerParams(
            dimension_semantics=("parallel",),
            vmem_limit_bytes=vmem_limit_bytes),
    )(*inputs)

    def to_out(a):
        a = a.reshape(B, Cout, Ho, Wo)          # free: storage order already NCHW
        return a if out_format == "NCHW" else a.transpose(0, 2, 3, 1)

    out12 = to_out(outs[0])
    if not compute_extra:
        return out12
    return out12, to_out(outs[1])


# ----------------------------- pure-JAX references -----------------------------
def _reference_out12(x, w12, b12, g12, bt12, rm12, rv12, eps=1e-5):
    y = jax.lax.conv_general_dilated(x, w12, window_strides=(2, 2),
                                     padding=((1, 1), (1, 1)),
                                     dimension_numbers=("NCHW", "OIHW", "NCHW"))
    y = y + b12[None, :, None, None]
    s = g12 / jnp.sqrt(rv12 + eps)
    t = bt12 - rm12 * s
    return y * s[None, :, None, None] + t[None, :, None, None]


def _reference_full(x, params, eps=1e-5):
    (w11, b11, g11, bt11, rm11, rv11,
     w12, b12, g12, bt12, rm12, rv12, w13, b13) = params
    B, Cin, H, W = x.shape
    Ho, Wo = (H + 1) // 2, (W + 1) // 2
    out12 = _reference_out12(x, w12, b12, g12, bt12, rm12, rv12, eps)
    xpad = jnp.pad(x, ((0, 0), (0, 0), (1, 1), (1, 1)))
    pooled = sum(xpad[:, :, kh:kh + 2 * Ho:2, kw:kw + 2 * Wo:2]
                 for kh in range(3) for kw in range(3)) / 9.0
    conv11 = jnp.einsum("bchw,oc->bohw", pooled, w11[:, :, 0, 0]) + b11[None, :, None, None]
    s11 = g11 / jnp.sqrt(rv11 + eps)
    out11 = conv11 * s11[None, :, None, None] + (bt11 - rm11 * s11)[None, :, None, None]
    gmean = jnp.mean(x, axis=(2, 3))
    out2 = jax.nn.sigmoid(gmean @ w13[:, :, 0, 0].T + b13)[:, :, None, None]
    return out12, (out11 + out12) * out2


if __name__ == "__main__":
    B, Cin, Cout, H, W = 2, 4, 8, 16, 16

    key = jax.random.PRNGKey(0)
    ks = jax.random.split(key, 16)

    def nrm(k, shape, scale=0.1):
        return scale * jax.random.normal(k, shape, jnp.float32)

    # block11: avgpool3x3 + conv1x1(s2) + BN
    w11, b11 = nrm(ks[0], (Cout, Cin, 1, 1)), nrm(ks[1], (Cout,))
    g11, bt11 = 1.0 + nrm(ks[2], (Cout,)), nrm(ks[3], (Cout,))
    rm11 = nrm(ks[4], (Cout,))
    rv11 = 1.0 + 0.5 * jax.random.uniform(ks[5], (Cout,), jnp.float32)
    # block12: conv3x3(s2,p1) + BN
    w12, b12 = nrm(ks[6], (Cout, Cin, 3, 3)), nrm(ks[7], (Cout,))
    g12, bt12 = 1.0 + nrm(ks[8], (Cout,)), nrm(ks[9], (Cout,))
    rm12 = nrm(ks[10], (Cout,))
    rv12 = 1.0 + 0.5 * jax.random.uniform(ks[11], (Cout,), jnp.float32)
    # block13: conv1x1 + sigmoid
    w13, b13 = nrm(ks[12], (Cout, Cin, 1, 1)), nrm(ks[13], (Cout,))

    params = (w11, b11, g11, bt11, rm11, rv11,
              w12, b12, g12, bt12, rm12, rv12,
              w13, b13)

    x = jax.random.normal(ks[14], (B, Cin, H, W), jnp.float32)
    ref12, ref_extra = _reference_full(x, params)

    # f32 compute path: tight check of the folded-BN / tap-gather math.
    out12_f32 = downsampling_forward(x, params, compute_dtype=jnp.float32)
    jax.block_until_ready(out12_f32)
    assert out12_f32.shape == (B, Cout, H // 2, W // 2), out12_f32.shape
    err = float(jnp.max(jnp.abs(out12_f32 - ref12)))
    assert err < 1e-4, f"f32 out12 max abs err = {err}"

    # Default bf16 data path (what production would use): looser tolerance.
    out12 = downsampling_forward(x, params)
    jax.block_until_ready(out12)
    err = float(jnp.max(jnp.abs(out12 - ref12)))
    assert err < 5e-2, f"bf16 out12 max abs err = {err}"

    # Debug path: also emit (out11 + out12) * sigmoid(block13(gap(x))).
    out12b, out_extra = downsampling_forward(x, params, compute_extra=True)
    jax.block_until_ready((out12b, out_extra))
    err12b = float(jnp.max(jnp.abs(out12b - ref12)))
    err_ex = float(jnp.max(jnp.abs(out_extra - ref_extra)))
    assert err12b < 5e-2, f"out12 (extra path) max abs err = {err12b}"
    assert err_ex < 5e-2, f"extra output max abs err = {err_ex}"

    print("KERNEL_OK")
</pallas_src>

<mosaic_0001>
module attributes {stable_mosaic.version = 11 : i64} {
  func.func @_downsampling_kernel(%arg0: i32, %arg1: memref<4x9x9x4xf32, #tpu.memory_space<vmem>>, %arg2: memref<9x8x4xf32, #tpu.memory_space<vmem>>, %arg3: memref<8x1xf32, #tpu.memory_space<vmem>>, %arg4: memref<1x8x64xf32, #tpu.memory_space<vmem>>) attributes {dimension_semantics = [#tpu.dimension_semantics<parallel>], iteration_bounds = array<i64: 2>, scalar_prefetch = 0 : i64, scratch_operands = 0 : i64, tpu.core_type = #tpu.core_type<tc>, window_params = [{transform_indices = @transform_0, window_bounds = array<i64: 4, 9, 9, 4>}, {pipeline_mode = #tpu.pipeline_mode<synchronous>, transform_indices = @transform_1, window_bounds = array<i64: 9, 8, 4>}, {pipeline_mode = #tpu.pipeline_mode<synchronous>, transform_indices = @transform_2, window_bounds = array<i64: 8, 1>}, {transform_indices = @transform_3, window_bounds = array<i64: 1, 8, 64>}]} {
    %c0 = arith.constant 0 : index
    %c0_0 = arith.constant 0 : index
    %c0_1 = arith.constant 0 : index
    %0 = vector.load %arg2[%c0, %c0_0, %c0_1] : memref<9x8x4xf32, #tpu.memory_space<vmem>>, vector<1x8x4xf32>
    %1 = vector.shape_cast %0 : vector<1x8x4xf32> to vector<8x4xf32>
    %c1 = arith.constant 1 : index
    %c0_2 = arith.constant 0 : index
    %c0_3 = arith.constant 0 : index
    %2 = vector.load %arg2[%c1, %c0_2, %c0_3] : memref<9x8x4xf32, #tpu.memory_space<vmem>>, vector<1x8x4xf32>
    %3 = vector.shape_cast %2 : vector<1x8x4xf32> to vector<8x4xf32>
    %c2 = arith.constant 2 : index
    %c0_4 = arith.constant 0 : index
    %c0_5 = arith.constant 0 : index
    %4 = vector.load %arg2[%c2, %c0_4, %c0_5] : memref<9x8x4xf32, #tpu.memory_space<vmem>>, vector<1x8x4xf32>
    %5 = vector.shape_cast %4 : vector<1x8x4xf32> to vector<8x4xf32>
    %c3 = arith.constant 3 : index
    %c0_6 = arith.constant 0 : index
    %c0_7 = arith.constant 0 : index
    %6 = vector.load %arg2[%c3, %c0_6, %c0_7] : memref<9x8x4xf32, #tpu.memory_space<vmem>>, vector<1x8x4xf32>
    %7 = vector.shape_cast %6 : vector<1x8x4xf32> to vector<8x4xf32>
    %c4 = arith.constant 4 : index
    %c0_8 = arith.constant 0 : index
    %c0_9 = arith.constant 0 : index
    %8 = vector.load %arg2[%c4, %c0_8, %c0_9] : memref<9x8x4xf32, #tpu.memory_space<vmem>>, vector<1x8x4xf32>
    %9 = vector.shape_cast %8 : vector<1x8x4xf32> to vector<8x4xf32>
    %c5 = arith.constant 5 : index
    %c0_10 = arith.constant 0 : index
    %c0_11 = arith.constant 0 : index
    %10 = vector.load %arg2[%c5, %c0_10, %c0_11] : memref<9x8x4xf32, #tpu.memory_space<vmem>>, vector<1x8x4xf32>
    %11 = vector.shape_cast %10 : vector<1x8x4xf32> to vector<8x4xf32>
    %c6 = arith.constant 6 : index
    %c0_12 = arith.constant 0 : index
    %c0_13 = arith.constant 0 : index
    %12 = vector.load %arg2[%c6, %c0_12, %c0_13] : memref<9x8x4xf32, #tpu.memory_space<vmem>>, vector<1x8x4xf32>
    %13 = vector.shape_cast %12 : vector<1x8x4xf32> to vector<8x4xf32>
    %c7 = arith.constant 7 : index
    %c0_14 = arith.constant 0 : index
    %c0_15 = arith.constant 0 : index
    %14 = vector.load %arg2[%c7, %c0_14, %c0_15] : memref<9x8x4xf32, #tpu.memory_space<vmem>>, vector<1x8x4xf32>
    %15 = vector.shape_cast %14 : vector<1x8x4xf32> to vector<8x4xf32>
    %c8 = arith.constant 8 : index
    %c0_16 = arith.constant 0 : index
    %c0_17 = arith.constant 0 : index
    %16 = vector.load %arg2[%c8, %c0_16, %c0_17] : memref<9x8x4xf32, #tpu.memory_space<vmem>>, vector<1x8x4xf32>
    %17 = vector.shape_cast %16 : vector<1x8x4xf32> to vector<8x4xf32>
    %c0_18 = arith.constant 0 : index
    %c0_19 = arith.constant 0 : index
    %18 = vector.load %arg3[%c0_18, %c0_19] : memref<8x1xf32, #tpu.memory_space<vmem>>, vector<8x1xf32>
    %cst = arith.constant 0.000000e+00 : f32
    %19 = vector.broadcast %cst : f32 to vector<8x64xf32>
    %c0_20 = arith.constant 0 : index
    %c0_21 = arith.constant 0 : index
    %c0_22 = arith.constant 0 : index
    %c0_23 = arith.constant 0 : index
    %20 = vector.load %arg1[%c0_20, %c0_21, %c0_22, %c0_23] : memref<4x9x9x4xf32, #tpu.memory_space<vmem>>, vector<1x8x8x4xf32>
    %21 = vector.shape_cast %20 : vector<1x8x8x4xf32> to vector<8x8x4xf32>
    %22 = vector.shape_cast %21 : vector<8x8x4xf32> to vector<64x4xf32>
    %cst_24 = arith.constant dense<0.000000e+00> : vector<8x64xf32>
    %23 = tpu.matmul %1, %22, %cst_24 {dimension_numbers = #tpu.dot_dimension_numbers<[1], [1], [0], [0], [0, 0, 1, 0], [], []>} : vector<8x4xf32>, vector<64x4xf32>, vector<8x64xf32> -> vector<8x64xf32>
    %24 = arith.addf %19, %23 : vector<8x64xf32>
    %c1_25 = arith.constant 1 : index
    %c0_26 = arith.constant 0 : index
    %c0_27 = arith.constant 0 : index
    %c0_28 = arith.constant 0 : index
    %25 = vector.load %arg1[%c1_25, %c0_26, %c0_27, %c0_28] : memref<4x9x9x4xf32, #tpu.memory_space<vmem>>, vector<1x8x8x4xf32>
    %26 = vector.shape_cast %25 : vector<1x8x8x4xf32> to vector<8x8x4xf32>
    %27 = vector.shape_cast %26 : vector<8x8x4xf32> to vector<64x4xf32>
    %cst_29 = arith.constant dense<0.000000e+00> : vector<8x64xf32>
    %28 = tpu.matmul %3, %27, %cst_29 {dimension_numbers = #tpu.dot_dimension_numbers<[1], [1], [0], [0], [0, 0, 1, 0], [], []>} : vector<8x4xf32>, vector<64x4xf32>, vector<8x64xf32> -> vector<8x64xf32>
    %29 = arith.addf %24, %28 : vector<8x64xf32>
    %c0_30 = arith.constant 0 : index
    %c0_31 = arith.constant 0 : index
    %c1_32 = arith.constant 1 : index
    %c0_33 = arith.constant 0 : index
    %30 = vector.load %arg1[%c0_30, %c0_31, %c1_32, %c0_33] : memref<4x9x9x4xf32, #tpu.memory_space<vmem>>, vector<1x8x8x4xf32>
    %31 = vector.shape_cast %30 : vector<1x8x8x4xf32> to vector<8x8x4xf32>
    %32 = vector.shape_cast %31 : vector<8x8x4xf32> to vector<64x4xf32>
    %cst_34 = arith.constant dense<0.000000e+00> : vector<8x64xf32>
    %33 = tpu.matmul %5, %32, %cst_34 {dimension_numbers = #tpu.dot_dimension_numbers<[1], [1], [0], [0], [0, 0, 1, 0], [], []>} : vector<8x4xf32>, vector<64x4xf32>, vector<8x64xf32> -> vector<8x64xf32>
    %34 = arith.addf %29, %33 : vector<8x64xf32>
    %c2_35 = arith.constant 2 : index
    %c0_36 = arith.constant 0 : index
    %c0_37 = arith.constant 0 : index
    %c0_38 = arith.constant 0 : index
    %35 = vector.load %arg1[%c2_35, %c0_36, %c0_37, %c0_38] : memref<4x9x9x4xf32, #tpu.memory_space<vmem>>, vector<1x8x8x4xf32>
    %36 = vector.shape_cast %35 : vector<1x8x8x4xf32> to vector<8x8x4xf32>
    %37 = vector.shape_cast %36 : vector<8x8x4xf32> to vector<64x4xf32>
    %cst_39 = arith.constant dense<0.000000e+00> : vector<8x64xf32>
    %38 = tpu.matmul %7, %37, %cst_39 {dimension_numbers = #tpu.dot_dimension_numbers<[1], [1], [0], [0], [0, 0, 1, 0], [], []>} : vector<8x4xf32>, vector<64x4xf32>, vector<8x64xf32> -> vector<8x64xf32>
    %39 = arith.addf %34, %38 : vector<8x64xf32>
    %c3_40 = arith.constant 3 : index
    %c0_41 = arith.constant 0 : index
    %c0_42 = arith.constant 0 : index
    %c0_43 = arith.constant 0 : index
    %40 = vector.load %arg1[%c3_40, %c0_41, %c0_42, %c0_43] : memref<4x9x9x4xf32, #tpu.memory_space<vmem>>, vector<1x8x8x4xf32>
    %41 = vector.shape_cast %40 : vector<1x8x8x4xf32> to vector<8x8x4xf32>
    %42 = vector.shape_cast %41 : vector<8x8x4xf32> to vector<64x4xf32>
    %cst_44 = arith.constant dense<0.000000e+00> : vector<8x64xf32>
    %43 = tpu.matmul %9, %42, %cst_44 {dimension_numbers = #tpu.dot_dimension_numbers<[1], [1], [0], [0], [0, 0, 1, 0], [], []>} : vector<8x4xf32>, vector<64x4xf32>, vector<8x64xf32> -> vector<8x64xf32>
    %44 = arith.addf %39, %43 : vector<8x64xf32>
    %c2_45 = arith.constant 2 : index
    %c0_46 = arith.constant 0 : index
    %c1_47 = arith.constant 1 : index
    %c0_48 = arith.constant 0 : index
    %45 = vector.load %arg1[%c2_45, %c0_46, %c1_47, %c0_48] : memref<4x9x9x4xf32, #tpu.memory_space<vmem>>, vector<1x8x8x4xf32>
    %46 = vector.shape_cast %45 : vector<1x8x8x4xf32> to vector<8x8x4xf32>
    %47 = vector.shape_cast %46 : vector<8x8x4xf32> to vector<64x4xf32>
    %cst_49 = arith.constant dense<0.000000e+00> : vector<8x64xf32>
    %48 = tpu.matmul %11, %47, %cst_49 {dimension_numbers = #tpu.dot_dimension_numbers<[1], [1], [0], [0], [0, 0, 1, 0], [], []>} : vector<8x4xf32>, vector<64x4xf32>, vector<8x64xf32> -> vector<8x64xf32>
    %49 = arith.addf %44, %48 : vector<8x64xf32>
    %c0_50 = arith.constant 0 : index
    %c1_51 = arith.constant 1 : index
    %c0_52 = arith.constant 0 : index
    %c0_53 = arith.constant 0 : index
    %50 = vector.load %arg1[%c0_50, %c1_51, %c0_52, %c0_53] : memref<4x9x9x4xf32, #tpu.memory_space<vmem>>, vector<1x8x8x4xf32>
    %51 = vector.shape_cast %50 : vector<1x8x8x4xf32> to vector<8x8x4xf32>
    %52 = vector.shape_cast %51 : vector<8x8x4xf32> to vector<64x4xf32>
    %cst_54 = arith.constant dense<0.000000e+00> : vector<8x64xf32>
    %53 = tpu.matmul %13, %52, %cst_54 {dimension_numbers = #tpu.dot_dimension_numbers<[1], [1], [0], [0], [0, 0, 1, 0], [], []>} : vector<8x4xf32>, vector<64x4xf32>, vector<8x64xf32> -> vector<8x64xf32>
    %54 = arith.addf %49, %53 : vector<8x64xf32>
    %c1_55 = arith.constant 1 : index
    %c1_56 = arith.constant 1 : index
    %c0_57 = arith.constant 0 : index
    %c0_58 = arith.constant 0 : index
    %55 = vector.load %arg1[%c1_55, %c1_56, %c0_57, %c0_58] : memref<4x9x9x4xf32, #tpu.memory_space<vmem>>, vector<1x8x8x4xf32>
    %56 = vector.shape_cast %55 : vector<1x8x8x4xf32> to vector<8x8x4xf32>
    %57 = vector.shape_cast %56 : vector<8x8x4xf32> to vector<64x4xf32>
    %cst_59 = arith.constant dense<0.000000e+00> : vector<8x64xf32>
    %58 = tpu.matmul %15, %57, %cst_59 {dimension_numbers = #tpu.dot_dimension_numbers<[1], [1], [0], [0], [0, 0, 1, 0], [], []>} : vector<8x4xf32>, vector<64x4xf32>, vector<8x64xf32> -> vector<8x64xf32>
    %59 = arith.addf %54, %58 : vector<8x64xf32>
    %c0_60 = arith.constant 0 : index
    %c1_61 = arith.constant 1 : index
    %c1_62 = arith.constant 1 : index
    %c0_63 = arith.constant 0 : index
    %60 = vector.load %arg1[%c0_60, %c1_61, %c1_62, %c0_63] : memref<4x9x9x4xf32, #tpu.memory_space<vmem>>, vector<1x8x8x4xf32>
    %61 = vector.shape_cast %60 : vector<1x8x8x4xf32> to vector<8x8x4xf32>
    %62 = vector.shape_cast %61 : vector<8x8x4xf32> to vector<64x4xf32>
    %cst_64 = arith.constant dense<0.000000e+00> : vector<8x64xf32>
    %63 = tpu.matmul %17, %62, %cst_64 {dimension_numbers = #tpu.dot_dimension_numbers<[1], [1], [0], [0], [0, 0, 1, 0], [], []>} : vector<8x4xf32>, vector<64x4xf32>, vector<8x64xf32> -> vector<8x64xf32>
    %64 = arith.addf %59, %63 : vector<8x64xf32>
    %65 = vector.broadcast %18 : vector<8x1xf32> to vector<8x64xf32>
    %66 = arith.addf %64, %65 : vector<8x64xf32>
    %c0_65 = arith.constant 0 : index
    %c0_66 = arith.constant 0 : index
    %c0_67 = arith.constant 0 : index
    %67 = vector.load %arg4[%c0_65, %c0_66, %c0_67] : memref<1x8x64xf32, #tpu.memory_space<vmem>>, vector<1x8x64xf32>
    %68 = vector.shape_cast %67 : vector<1x8x64xf32> to vector<8x64xf32>
    %69 = vector.shape_cast %66 : vector<8x64xf32> to vector<1x8x64xf32>
    tpu.vector_store %arg4[%c0_65, %c0_66, %c0_67], %69 {strides = array<i32>} : memref<1x8x64xf32, #tpu.memory_space<vmem>>, vector<1x8x64xf32>,
    return
  }
  func.func @transform_0(%arg0: i32) -> (i32, i32, i32, i32) {
    %c0_i32 = arith.constant 0 : i32
    %c0_i32_0 = arith.constant 0 : i32
    %c0_i32_1 = arith.constant 0 : i32
    %c0_i32_2 = arith.constant 0 : i32
    return %arg0, %c0_i32, %c0_i32_0, %c0_i32_1 : i32, i32, i32, i32
  }
  func.func @transform_1(%arg0: i32) -> (i32, i32, i32) {
    %c0_i32 = arith.constant 0 : i32
    %c0_i32_0 = arith.constant 0 : i32
    %c0_i32_1 = arith.constant 0 : i32
    %c0_i32_2 = arith.constant 0 : i32
    return %c0_i32, %c0_i32_0, %c0_i32_1 : i32, i32, i32
  }
  func.func @transform_2(%arg0: i32) -> (i32, i32) {
    %c0_i32 = arith.constant 0 : i32
    %c0_i32_0 = arith.constant 0 : i32
    %c0_i32_1 = arith.constant 0 : i32
    return %c0_i32, %c0_i32_0 : i32, i32
  }
  func.func @transform_3(%arg0: i32) -> (i32, i32, i32) {
    %c0_i32 = arith.constant 0 : i32
    %c0_i32_0 = arith.constant 0 : i32
    %c0_i32_1 = arith.constant 0 : i32
    return %arg0, %c0_i32, %c0_i32_0 : i32, i32, i32
  }
}

</mosaic_0001>

<llo_original>
// kernel: tpu_custom_call.1
$region0: #{tpu_custom_call.1}
  #allocation0 [shape = 'u32[]', space=smem, size = 0x4, offset = 0x4, fixed_abs, tag = 'smem constant byte address 0x4 - core index']
  #allocation1 [shape = 'u32[144,128]{1,0:T(1,128)}', space=vmem, size = 0x12000, scoped, tag = 'internal scratch']
  %s0 = inlined_call_operand.vmem [shape: f32[8,9,9,4], index: 0, kind: input, shape index: {}]
  %s1 = inlined_call_operand.vmem [shape: f32[9,8,4], index: 1, kind: input, shape index: {}]
  %s2 = inlined_call_operand.vmem [shape: f32[8,1], index: 2, kind: input, shape index: {}]
  %s3 = inlined_call_operand.hbm [shape: f32[2,8,64], index: 3, kind: output, shape index: {}]
  %s4 = sld [smem:[#allocation0]]
  $region45: #{tpu_custom_call.1} parent=0
    _
  %s6 = ssub.s32 1, %s4
  %s7 = scalar_select 0, %s6, %s4
  $region1: #{tpu_custom_call.1} parent=0
    #allocation2 [shape = 'u8[8192]{0}', space=vmem, size = 0x2000, scoped, tag = 'output window, operand 0']
    #allocation3 [shape = 's32[2]{0}', space=sflag, size = 0x8, scoped, tag = 'scoped memory for tpu_custom_call.1']
    %8 = vsyncpa [#allocation3], 0
    %s9 = scalar_lea.sflag [#allocation3], 1
    %10 = vsyncpa %s9, 0
    loop: start=0, step=1, limit=4
    $region2: #{tpu_custom_call.1} parent=1 // loop_pre_header
      _
    $region3: #{tpu_custom_call.1} parent=1 // loop_header
      %s12 = sphi 0, %s16
      %p13 = scmp.ge.s32.totalorder %s12, 4
      %s22 = sphi 0, %s24
      %s25 = sphi 0, %s22
      %s26 = sphi 0, %s25
      %s42 = sphi 0, %s26
      %s46 = sphi 0, %s46
      %s48 = sphi 0, %s46
      %s49 = sphi 0, %s48
      %s63 = sphi 0, %s49
      %s67 = sphi 0, %s67
      %s69 = sphi 0, %s67
      %s70 = sphi 0, %s69
      %s84 = sphi 0, %s70
      %s90 = sphi 0, %s92
      %s93 = sphi 0, %s90
      %s94 = sphi 0, %s93
      %s110 = sphi 0, %s94
    $region4: #{tpu_custom_call.1} parent=1 // loop_header_branch
      %15 = sbr.rel (%p13) target = $region8
    $region5: #{tpu_custom_call.1} parent=1 // loop_body
      %s17 = ssub.s32 %s12, 1
      %s18 = ssub.s32 %s12, 2
      %s19 = sadd.s32 %s12, 1
      %s20 = ssub.s32 %s12, %s19
      %p21 = scmp.eq.s32.totalorder %s20, 0
      %s23 = sadd.s32 %s22, 1
      %s24 = scalar_select %p21, %s22, %s23
      %p27 = pneg %p21
      %p28 = scmp.eq.s32.totalorder %s12, 1
      %p29 = por %p27, %p28
      %p30 = scmp.ne.s32.totalorder %s22, %s25
      %p31 = scmp.eq.s32.totalorder %s12, 0
      %p32 = por %p30, %p31
      %p33 = scmp.ne.s32.totalorder %s22, %s25
      %p34 = scmp.eq.s32.totalorder %s17, 1
      %p35 = por %p33, %p34
      %p36 = scmp.ne.s32.totalorder %s25, %s26
      %p37 = scmp.eq.s32.totalorder %s17, 0
      %p38 = por %p36, %p37
      %p39 = scmp.ne.s32.totalorder %s25, %s26
      %p40 = scmp.eq.s32.totalorder %s18, 1
      %p41 = por %p39, %p40
      %p43 = scmp.ne.s32.totalorder %s26, %s42
      %p44 = scmp.eq.s32.totalorder %s18, 0
      %p45 = por %p43, %p44
      %s47 = sadd.s32 %s46, 1
      %p50 = scmp.eq.s32.totalorder %s12, 1
      %p51 = scmp.ne.s32.totalorder %s46, %s48
      %p52 = scmp.eq.s32.totalorder %s12, 0
      %p53 = por %p51, %p52
      %p54 = scmp.ne.s32.totalorder %s46, %s48
      %p55 = scmp.eq.s32.totalorder %s17, 1
      %p56 = por %p54, %p55
      %p57 = scmp.ne.s32.totalorder %s48, %s49
      %p58 = scmp.eq.s32.totalorder %s17, 0
      %p59 = por %p57, %p58
      %p60 = scmp.ne.s32.totalorder %s48, %s49
      %p61 = scmp.eq.s32.totalorder %s18, 1
      %p62 = por %p60, %p61
      %p64 = scmp.ne.s32.totalorder %s49, %s63
      %p65 = scmp.eq.s32.totalorder %s18, 0
      %p66 = por %p64, %p65
      %s68 = sadd.s32 %s67, 1
      %p71 = scmp.eq.s32.totalorder %s12, 1
      %p72 = scmp.ne.s32.totalorder %s67, %s69
      %p73 = scmp.eq.s32.totalorder %s12, 0
      %p74 = por %p72, %p73
      %p75 = scmp.ne.s32.totalorder %s67, %s69
      %p76 = scmp.eq.s32.totalorder %s17, 1
      %p77 = por %p75, %p76
      %p78 = scmp.ne.s32.totalorder %s69, %s70
      %p79 = scmp.eq.s32.totalorder %s17, 0
      %p80 = por %p78, %p79
      %p81 = scmp.ne.s32.totalorder %s69, %s70
      %p82 = scmp.eq.s32.totalorder %s18, 1
      %p83 = por %p81, %p82
      %p85 = scmp.ne.s32.totalorder %s70, %s84
      %p86 = scmp.eq.s32.totalorder %s18, 0
      %p87 = por %p85, %p86
      %s88 = ssub.s32 %s12, %s19
      %p89 = scmp.eq.s32.totalorder %s88, 0
      %s91 = sadd.s32 %s90, 1
      %s92 = scalar_select %p89, %s90, %s91
      %p95 = pneg %p89
      %p96 = scmp.eq.s32.totalorder %s12, 1
      %p97 = por %p95, %p96
      %p98 = scmp.ne.s32.totalorder %s90, %s93
      %p99 = scmp.eq.s32.totalorder %s12, 0
      %p100 = por %p98, %p99
      %p101 = scmp.ne.s32.totalorder %s90, %s93
      %p102 = scmp.eq.s32.totalorder %s17, 1
      %p103 = por %p101, %p102
      %p104 = scmp.ne.s32.totalorder %s93, %s94
      %p105 = scmp.eq.s32.totalorder %s17, 0
      %p106 = por %p104, %p105
      %p107 = scmp.ne.s32.totalorder %s93, %s94
      %p108 = scmp.eq.s32.totalorder %s18, 1
      %p109 = por %p107, %p108
      %p111 = scmp.ne.s32.totalorder %s94, %s110
      %p112 = scmp.eq.s32.totalorder %s18, 0
      %p113 = por %p111, %p112
      %p114 = scmp.le.s32.totalorder 1, %s12
      %p115 = scmp.lt.s32.totalorder %s12, 3
      %p116 = pnand %p114, %p115
      %p117 = pneg %p116
      // Predicated region
      $region9: #{tpu_custom_call.1} parent=5 // pred_check
        _
      $region10: #{tpu_custom_call.1} parent=5 // pred_check_branch
        %119 = sbr.rel (%p116) target = $region12
      $region11: #{tpu_custom_call.1} parent=5 // pred_region
        %s120 = ssub.s32 %s12, 1
        // Predicated region
        $region13: #{tpu_custom_call.1} parent=11 // pred_check
          %p121 = pneg %p59
        $region14: #{tpu_custom_call.1} parent=11 // pred_check_branch
          %123 = sbr.rel (%p121) target = $region16
        $region15: #{tpu_custom_call.1} parent=11 // pred_region
          _
        $region16: #{tpu_custom_call.1} parent=11 // pred_fallthru
          _
        // Predicated region
        $region17: #{tpu_custom_call.1} parent=11 // pred_check
          %p124 = pneg %p80
        $region18: #{tpu_custom_call.1} parent=11 // pred_check_branch
          %126 = sbr.rel (%p124) target = $region20
        $region19: #{tpu_custom_call.1} parent=11 // pred_region
          _
        $region20: #{tpu_custom_call.1} parent=11 // pred_fallthru
          _
      $region12: #{tpu_custom_call.1} parent=5 // pred_fallthru
        _
      %p127 = scmp.lt.s32.totalorder %s12, 2
      // Predicated region
      $region21: #{tpu_custom_call.1} parent=5 // pred_check
        %p128 = pneg %p127
      $region22: #{tpu_custom_call.1} parent=5 // pred_check_branch
        %130 = sbr.rel (%p128) target = $region24
      $region23: #{tpu_custom_call.1} parent=5 // pred_region
        // Predicated region
        $region25: #{tpu_custom_call.1} parent=23 // pred_check
          %p131 = pneg %p32
        $region26: #{tpu_custom_call.1} parent=23 // pred_check_branch
          %133 = sbr.rel (%p131) target = $region28
        $region27: #{tpu_custom_call.1} parent=23 // pred_region
          %s134 = smul.u32 4, %s12
          %p135 = scmp.lt.s32.totalorder %s134, 7
          %s136 = scalar_select %p135, %s134, 7
          %s137 = smul.addr %s136, 18
          %s138 = smul.addr %s137, 8
          %s139 = scalar_lea.vmem %s0, %s138
          %s140 = smul.u32 4, %s12
        $region28: #{tpu_custom_call.1} parent=23 // pred_fallthru
          _
      $region24: #{tpu_custom_call.1} parent=5 // pred_fallthru
        _
      %p141 = scmp.le.s32.totalorder 1, %s12
      %p142 = scmp.lt.s32.totalorder %s12, 3
      %p143 = pnand %p141, %p142
      %p144 = pneg %p143
      // Predicated region
      $region29: #{tpu_custom_call.1} parent=5 // pred_check
        _
      $region30: #{tpu_custom_call.1} parent=5 // pred_check_branch
        %146 = sbr.rel (%p143) target = $region32
      $region31: #{tpu_custom_call.1} parent=5 // pred_region
        %s147 = ssub.s32 %s12, 1
        %s148 = smul.u32 4, %s17
        %p149 = scmp.lt.s32.totalorder %s148, 7
        %s150 = scalar_select %p149, %s148, 7
        %s151 = smul.addr %s150, 18
        %s152 = smul.addr %s151, 8
        %s153 = scalar_lea.vmem %s0, %s152
        %p154 = pneg %p38
        %p155 = pneg %p35
        %p156 = pneg %p59
        %p157 = pneg %p56
        %p158 = pneg %p80
        %p159 = pneg %p77
        %p160 = pneg %p106
        %p161 = pneg %p103
        %s162 = sand.u32 %s93, 1
        %s163 = scalar_lea.sflag [#allocation3], %s162
        %s164 = sand.u32 %s93, 1
        %s165 = smul.addr %s164, 8
        %s166 = scalar_lea.vmem [#allocation2], %s165
        %s167 = smul.u32 4, %s17
        %p168 = scmp.lt.s32.totalorder %s167, 7
        %s169 = scalar_select %p168, %s167, 7
        %s170 = smul.addr %s169, 18
        %s171 = smul.addr %s170, 8
        %s172 = scalar_lea.vmem %s0, %s171
        %s173 = smul.u32 4, %s17
        %v174 = vld [vmem:[%s1] sm:$0xff]
        %s175 = scalar_lea.vmem %s1, 8
        %v176 = vld [vmem:[%s175] sm:$0xff]
        %s177 = scalar_lea.vmem %s1, 16
        %v178 = vld [vmem:[%s177] sm:$0xff]
        %s179 = scalar_lea.vmem %s1, 24
        %v180 = vld [vmem:[%s179] sm:$0xff]
        %s181 = scalar_lea.vmem %s1, 32
        %v182 = vld [vmem:[%s181] sm:$0xff]
        %s183 = scalar_lea.vmem %s1, 40
        %v184 = vld [vmem:[%s183] sm:$0xff]
        %s185 = scalar_lea.vmem %s1, 48
        %v186 = vld [vmem:[%s185] sm:$0xff]
        %s187 = scalar_lea.vmem %s1, 56
        %v188 = vld [vmem:[%s187] sm:$0xff]
        %s189 = scalar_lea.vmem %s1, 64
        %v190 = vld [vmem:[%s189] sm:$0xff]
        %v191 = vld [vmem:[%s2] sm:$0xff]
        %v192 = vld [vmem:[%s172] sm:$0xff]
        %v193 = vld [vmem:[%s172 + $0x10] sm:$0xff]
        %v194 = vld [vmem:[%s172 + $0x20] sm:$0xff]
        %v195 = vld [vmem:[%s172 + $0x30] sm:$0xff]
        %v196 = vld [vmem:[%s172 + $0x40] sm:$0xff]
        %v197 = vld [vmem:[%s172 + $0x50] sm:$0xff]
        %v198 = vld [vmem:[%s172 + $0x60] sm:$0xff]
        %v199 = vld [vmem:[%s172 + $0x70] sm:$0xff]
        %s200 = scalar_lea.vmem %s172, 144
        %v201 = vld [vmem:[%s200] sm:$0xff]
        %v202 = vld [vmem:[%s200 + $0x10] sm:$0xff]
        %v203 = vld [vmem:[%s200 + $0x20] sm:$0xff]
        %v204 = vld [vmem:[%s200 + $0x30] sm:$0xff]
        %v205 = vld [vmem:[%s200 + $0x40] sm:$0xff]
        %v206 = vld [vmem:[%s200 + $0x50] sm:$0xff]
        %v207 = vld [vmem:[%s200 + $0x60] sm:$0xff]
        %v208 = vld [vmem:[%s200 + $0x70] sm:$0xff]
        %vm209 = vcmask 31744
        %v211 = vsel %vm209, %v176, 0
        %v214 = vsel %vm209, %v201, 0
        %v217 = vsel %vm209, %v202, 0
        %v220 = vsel %vm209, %v203, 0
        %v223 = vsel %vm209, %v204, 0
        %v226 = vsel %vm209, %v205, 0
        %v229 = vsel %vm209, %v206, 0
        %v232 = vsel %vm209, %v207, 0
        %v235 = vsel %vm209, %v208, 0
        %237 = vmatprep.subr.mxu0 0.0
        %238 = vmatpush1.xpose.msra.mxu0 %v214
        %239 = vmatprep.subr.mxu0 0.0
        %240 = vmatpush1.xpose.msra.mxu0 %v217
        %241 = vmatprep.subr.mxu0 0.0
        %242 = vmatpush1.xpose.msra.mxu0 %v220
        %243 = vmatprep.subr.mxu0 0.0
        %244 = vmatpush1.xpose.msra.mxu0 %v223
        %245 = vmatprep.subr.mxu0 0.0
        %246 = vmatpush1.xpose.msra.mxu0 %v226
        %247 = vmatprep.subr.mxu0 0.0
        %248 = vmatpush1.xpose.msra.mxu0 %v229
        %249 = vmatprep.subr.mxu0 0.0
        %250 = vmatpush1.xpose.msra.mxu0 %v232
        %251 = vmatprep.subr.mxu0 0.0
        %252 = vmatpush1.xpose.msra.mxu0 %v235
        %253 = vmatprep.subr.mxu0 0.0
        %254 = vmatpush1.xpose.msra.mxu0 0.0
        %255 = vmatprep.subr.mxu0 0.0
        %256 = vmatpush1.xpose.msra.mxu0 0.0
        %257 = vmatprep.subr.mxu0 0.0
        %258 = vmatpush1.xpose.msra.mxu0 0.0
        %259 = vmatprep.subr.mxu0 0.0
        %260 = vmatpush1.xpose.msra.mxu0 0.0
        %261 = vmatprep.subr.mxu0 0.0
        %262 = vmatpush1.xpose.msra.mxu0 0.0
        %263 = vmatprep.subr.mxu0 0.0
        %264 = vmatpush1.xpose.msra.mxu0 0.0
        %265 = vmatprep.subr.mxu0 0.0
        %266 = vmatpush1.xpose.msra.mxu0 0.0
        %267 = vmatprep.subr.mxu0 0.0
        %268 = vmatpush1.xpose.msra.mxu0 0.0
        %269 = vmatprep.subr.mxu0 0.0
        %270 = vmatpush1.xpose.msra.mxu0 0.0
        %271 = vmatprep.subr.mxu0 0.0
        %272 = vmatpush1.xpose.msra.mxu0 0.0
        %273 = vmatprep.subr.mxu0 0.0
        %274 = vmatpush1.xpose.msra.mxu0 0.0
        %275 = vmatprep.subr.mxu0 0.0
        %276 = vmatpush1.xpose.msra.mxu0 0.0
        %277 = vmatprep.subr.mxu0 0.0
        %278 = vmatpush1.xpose.msra.mxu0 0.0
        %279 = vmatprep.subr.mxu0 0.0
        %280 = vmatpush1.xpose.msra.mxu0 0.0
        %281 = vmatprep.subr.mxu0 0.0
        %282 = vmatpush1.xpose.msra.mxu0 0.0
        %283 = vmatprep.subr.mxu0 0.0
        %284 = vmatpush1.xpose.msra.mxu0 0.0
        %285 = vmatprep.subr.mxu0 0.0
        %286 = vmatpush1.xpose.msra.mxu0 0.0
        %287 = vmatprep.subr.mxu0 0.0
        %288 = vmatpush1.xpose.msra.mxu0 0.0
        %289 = vmatprep.subr.mxu0 0.0
        %290 = vmatpush1.xpose.msra.mxu0 0.0
        %291 = vmatprep.subr.mxu0 0.0
        %292 = vmatpush1.xpose.msra.mxu0 0.0
        %293 = vmatprep.subr.mxu0 0.0
        %294 = vmatpush1.xpose.msra.mxu0 0.0
        %295 = vmatprep.subr.mxu0 0.0
        %296 = vmatpush1.xpose.msra.mxu0 0.0
        %297 = vmatprep.subr.mxu0 0.0
        %298 = vmatpush1.xpose.msra.mxu0 0.0
        %299 = vmatprep.subr.mxu0 0.0
        %300 = vmatpush1.xpose.msra.mxu0 0.0
        %301 = vmatprep.mubr.f32.mxu0 0.0
        %302 = vmatmul.mubr.f32.gmra.mrb[0].mxu0 %v211
        %v303 = vpop.f32.mrb[0].mxu0
        %v304 = vadd.f32 0.0, %v303
        %v305 = vpop.f32.mrb[0].mxu0
        %306 = vdwg.mxu0
        %v308 = vsel %vm209, %v174, 0
        %v311 = vsel %vm209, %v192, 0
        %v314 = vsel %vm209, %v193, 0
        %v317 = vsel %vm209, %v194, 0
        %v320 = vsel %vm209, %v195, 0
        %v323 = vsel %vm209, %v196, 0
        %v326 = vsel %vm209, %v197, 0
        %v329 = vsel %vm209, %v198, 0
        %v332 = vsel %vm209, %v199, 0
        %334 = vmatprep.subr.mxu0 0.0
        %335 = vmatpush1.xpose.msra.mxu0 %v311
        %336 = vmatprep.subr.mxu0 0.0
        %337 = vmatpush1.xpose.msra.mxu0 %v314
        %338 = vmatprep.subr.mxu0 0.0
        %339 = vmatpush1.xpose.msra.mxu0 %v317
        %340 = vmatprep.subr.mxu0 0.0
        %341 = vmatpush1.xpose.msra.mxu0 %v320
        %342 = vmatprep.subr.mxu0 0.0
        %343 = vmatpush1.xpose.msra.mxu0 %v323
        %344 = vmatprep.subr.mxu0 0.0
        %345 = vmatpush1.xpose.msra.mxu0 %v326
        %346 = vmatprep.subr.mxu0 0.0
        %347 = vmatpush1.xpose.msra.mxu0 %v329
        %348 = vmatprep.subr.mxu0 0.0
        %349 = vmatpush1.xpose.msra.mxu0 %v332
        %350 = vmatprep.subr.mxu0 0.0
        %351 = vmatpush1.xpose.msra.mxu0 0.0
        %352 = vmatprep.subr.mxu0 0.0
        %353 = vmatpush1.xpose.msra.mxu0 0.0
        %354 = vmatprep.subr.mxu0 0.0
        %355 = vmatpush1.xpose.msra.mxu0 0.0
        %356 = vmatprep.subr.mxu0 0.0
        %357 = vmatpush1.xpose.msra.mxu0 0.0
        %358 = vmatprep.subr.mxu0 0.0
        %359 = vmatpush1.xpose.msra.mxu0 0.0
        %360 = vmatprep.subr.mxu0 0.0
        %361 = vmatpush1.xpose.msra.mxu0 0.0
        %362 = vmatprep.subr.mxu0 0.0
        %363 = vmatpush1.xpose.msra.mxu0 0.0
        %364 = vmatprep.subr.mxu0 0.0
        %365 = vmatpush1.xpose.msra.mxu0 0.0
        %366 = vmatprep.subr.mxu0 0.0
        %367 = vmatpush1.xpose.msra.mxu0 0.0
        %368 = vmatprep.subr.mxu0 0.0
        %369 = vmatpush1.xpose.msra.mxu0 0.0
        %370 = vmatprep.subr.mxu0 0.0
        %371 = vmatpush1.xpose.msra.mxu0 0.0
        %372 = vmatprep.subr.mxu0 0.0
        %373 = vmatpush1.xpose.msra.mxu0 0.0
        %374 = vmatprep.subr.mxu0 0.0
        %375 = vmatpush1.xpose.msra.mxu0 0.0
        %376 = vmatprep.subr.mxu0 0.0
        %377 = vmatpush1.xpose.msra.mxu0 0.0
        %378 = vmatprep.subr.mxu0 0.0
        %379 = vmatpush1.xpose.msra.mxu0 0.0
        %380 = vmatprep.subr.mxu0 0.0
        %381 = vmatpush1.xpose.msra.mxu0 0.0
        %382 = vmatprep.subr.mxu0 0.0
        %383 = vmatpush1.xpose.msra.mxu0 0.0
        %384 = vmatprep.subr.mxu0 0.0
        %385 = vmatpush1.xpose.msra.mxu0 0.0
        %386 = vmatprep.subr.mxu0 0.0
        %387 = vmatpush1.xpose.msra.mxu0 0.0
        %388 = vmatprep.subr.mxu0 0.0
        %389 = vmatpush1.xpose.msra.mxu0 0.0
        %390 = vmatprep.subr.mxu0 0.0
        %391 = vmatpush1.xpose.msra.mxu0 0.0
        %392 = vmatprep.subr.mxu0 0.0
        %393 = vmatpush1.xpose.msra.mxu0 0.0
        %394 = vmatprep.subr.mxu0 0.0
        %395 = vmatpush1.xpose.msra.mxu0 0.0
        %396 = vmatprep.subr.mxu0 0.0
        %397 = vmatpush1.xpose.msra.mxu0 0.0
        %398 = vmatprep.mubr.f32.mxu0 0.0
        %399 = vmatmul.mubr.f32.gmra.mrb[0].mxu0 %v308
        %v400 = vpop.f32.mrb[0].mxu0
        %v401 = vadd.f32 %v304, %v400
        %v402 = vpop.f32.mrb[0].mxu0
        %403 = vdwg.mxu0
        %v404 = vld [vmem:[%s172 + $0x1] sm:$0xff]
        %v405 = vld [vmem:[%s172 + $0x11] sm:$0xff]
        %v406 = vld [vmem:[%s172 + $0x21] sm:$0xff]
        %v407 = vld [vmem:[%s172 + $0x31] sm:$0xff]
        %v408 = vld [vmem:[%s172 + $0x41] sm:$0xff]
        %v409 = vld [vmem:[%s172 + $0x51] sm:$0xff]
        %v410 = vld [vmem:[%s172 + $0x61] sm:$0xff]
        %v411 = vld [vmem:[%s172 + $0x71] sm:$0xff]
        %v413 = vsel %vm209, %v178, 0
        %v416 = vsel %vm209, %v404, 0
        %v419 = vsel %vm209, %v405, 0
        %v422 = vsel %vm209, %v406, 0
        %v425 = vsel %vm209, %v407, 0
        %v428 = vsel %vm209, %v408, 0
        %v431 = vsel %vm209, %v409, 0
        %v434 = vsel %vm209, %v410, 0
        %v437 = vsel %vm209, %v411, 0
        %439 = vmatprep.subr.mxu0 0.0
        %440 = vmatpush1.xpose.msra.mxu0 %v416
        %441 = vmatprep.subr.mxu0 0.0
        %442 = vmatpush1.xpose.msra.mxu0 %v419
        %443 = vmatprep.subr.mxu0 0.0
        %444 = vmatpush1.xpose.msra.mxu0 %v422
        %445 = vmatprep.subr.mxu0 0.0
        %446 = vmatpush1.xpose.msra.mxu0 %v425
        %447 = vmatprep.subr.mxu0 0.0
        %448 = vmatpush1.xpose.msra.mxu0 %v428
        %449 = vmatprep.subr.mxu0 0.0
        %450 = vmatpush1.xpose.msra.mxu0 %v431
        %451 = vmatprep.subr.mxu0 0.0
        %452 = vmatpush1.xpose.msra.mxu0 %v434
        %453 = vmatprep.subr.mxu0 0.0
        %454 = vmatpush1.xpose.msra.mxu0 %v437
        %455 = vmatprep.subr.mxu0 0.0
        %456 = vmatpush1.xpose.msra.mxu0 0.0
        %457 = vmatprep.subr.mxu0 0.0
        %458 = vmatpush1.xpose.msra.mxu0 0.0
        %459 = vmatprep.subr.mxu0 0.0
        %460 = vmatpush1.xpose.msra.mxu0 0.0
        %461 = vmatprep.subr.mxu0 0.0
        %462 = vmatpush1.xpose.msra.mxu0 0.0
        %463 = vmatprep.subr.mxu0 0.0
        %464 = vmatpush1.xpose.msra.mxu0 0.0
        %465 = vmatprep.subr.mxu0 0.0
        %466 = vmatpush1.xpose.msra.mxu0 0.0
        %467 = vmatprep.subr.mxu0 0.0
        %468 = vmatpush1.xpose.msra.mxu0 0.0
        %469 = vmatprep.subr.mxu0 0.0
        %470 = vmatpush1.xpose.msra.mxu0 0.0
        %471 = vmatprep.subr.mxu0 0.0
        %472 = vmatpush1.xpose.msra.mxu0 0.0
        %473 = vmatprep.subr.mxu0 0.0
        %474 = vmatpush1.xpose.msra.mxu0 0.0
        %475 = vmatprep.subr.mxu0 0.0
        %476 = vmatpush1.xpose.msra.mxu0 0.0
        %477 = vmatprep.subr.mxu0 0.0
        %478 = vmatpush1.xpose.msra.mxu0 0.0
        %479 = vmatprep.subr.mxu0 0.0
        %480 = vmatpush1.xpose.msra.mxu0 0.0
        %481 = vmatprep.subr.mxu0 0.0
        %482 = vmatpush1.xpose.msra.mxu0 0.0
        %483 = vmatprep.subr.mxu0 0.0
        %484 = vmatpush1.xpose.msra.mxu0 0.0
        %485 = vmatprep.subr.mxu0 0.0
        %486 = vmatpush1.xpose.msra.mxu0 0.0
        %487 = vmatprep.subr.mxu0 0.0
        %488 = vmatpush1.xpose.msra.mxu0 0.0
        %489 = vmatprep.subr.mxu0 0.0
        %490 = vmatpush1.xpose.msra.mxu0 0.0
        %491 = vmatprep.subr.mxu0 0.0
        %492 = vmatpush1.xpose.msra.mxu0 0.0
        %493 = vmatprep.subr.mxu0 0.0
        %494 = vmatpush1.xpose.msra.mxu0 0.0
        %495 = vmatprep.subr.mxu0 0.0
        %496 = vmatpush1.xpose.msra.mxu0 0.0
        %497 = vmatprep.subr.mxu0 0.0
        %498 = vmatpush1.xpose.msra.mxu0 0.0
        %499 = vmatprep.subr.mxu0 0.0
        %500 = vmatpush1.xpose.msra.mxu0 0.0
        %501 = vmatprep.subr.mxu0 0.0
        %502 = vmatpush1.xpose.msra.mxu0 0.0
        %503 = vmatprep.mubr.f32.mxu0 0.0
        %504 = vmatmul.mubr.f32.gmra.mrb[0].mxu0 %v413
        %v505 = vpop.f32.mrb[0].mxu0
        %v506 = vadd.f32 0.0, %v505
        %v507 = vpop.f32.mrb[0].mxu0
        %508 = vdwg.mxu0
        %v509 = vadd.f32 %v401, %v506
        %s510 = scalar_lea.vmem %s172, 288
        %v511 = vld [vmem:[%s510] sm:$0xff]
        %v512 = vld [vmem:[%s510 + $0x10] sm:$0xff]
        %v513 = vld [vmem:[%s510 + $0x20] sm:$0xff]
        %v514 = vld [vmem:[%s510 + $0x30] sm:$0xff]
        %v515 = vld [vmem:[%s510 + $0x40] sm:$0xff]
        %v516 = vld [vmem:[%s510 + $0x50] sm:$0xff]
        %v517 = vld [vmem:[%s510 + $0x60] sm:$0xff]
        %v518 = vld [vmem:[%s510 + $0x70] sm:$0xff]
        %v520 = vsel %vm209, %v180, 0
        %v523 = vsel %vm209, %v511, 0
        %v526 = vsel %vm209, %v512, 0
        %v529 = vsel %vm209, %v513, 0
        %v532 = vsel %vm209, %v514, 0
        %v535 = vsel %vm209, %v515, 0
        %v538 = vsel %vm209, %v516, 0
        %v541 = vsel %vm209, %v517, 0
        %v544 = vsel %vm209, %v518, 0
        %546 = vmatprep.subr.mxu0 0.0
        %547 = vmatpush1.xpose.msra.mxu0 %v523
        %548 = vmatprep.subr.mxu0 0.0
        %549 = vmatpush1.xpose.msra.mxu0 %v526
        %550 = vmatprep.subr.mxu0 0.0
        %551 = vmatpush1.xpose.msra.mxu0 %v529
        %552 = vmatprep.subr.mxu0 0.0
        %553 = vmatpush1.xpose.msra.mxu0 %v532
        %554 = vmatprep.subr.mxu0 0.0
        %555 = vmatpush1.xpose.msra.mxu0 %v535
        %556 = vmatprep.subr.mxu0 0.0
        %557 = vmatpush1.xpose.msra.mxu0 %v538
        %558 = vmatprep.subr.mxu0 0.0
        %559 = vmatpush1.xpose.msra.mxu0 %v541
        %560 = vmatprep.subr.mxu0 0.0
        %561 = vmatpush1.xpose.msra.mxu0 %v544
        %562 = vmatprep.subr.mxu0 0.0
        %563 = vmatpush1.xpose.msra.mxu0 0.0
        %564 = vmatprep.subr.mxu0 0.0
        %565 = vmatpush1.xpose.msra.mxu0 0.0
        %566 = vmatprep.subr.mxu0 0.0
        %567 = vmatpush1.xpose.msra.mxu0 0.0
        %568 = vmatprep.subr.mxu0 0.0
        %569 = vmatpush1.xpose.msra.mxu0 0.0
        %570 = vmatprep.subr.mxu0 0.0
        %571 = vmatpush1.xpose.msra.mxu0 0.0
        %572 = vmatprep.subr.mxu0 0.0
        %573 = vmatpush1.xpose.msra.mxu0 0.0
        %574 = vmatprep.subr.mxu0 0.0
        %575 = vmatpush1.xpose.msra.mxu0 0.0
        %576 = vmatprep.subr.mxu0 0.0
        %577 = vmatpush1.xpose.msra.mxu0 0.0
        %578 = vmatprep.subr.mxu0 0.0
        %579 = vmatpush1.xpose.msra.mxu0 0.0
        %580 = vmatprep.subr.mxu0 0.0
        %581 = vmatpush1.xpose.msra.mxu0 0.0
        %582 = vmatprep.subr.mxu0 0.0
        %583 = vmatpush1.xpose.msra.mxu0 0.0
        %584 = vmatprep.subr.mxu0 0.0
        %585 = vmatpush1.xpose.msra.mxu0 0.0
        %586 = vmatprep.subr.mxu0 0.0
        %587 = vmatpush1.xpose.msra.mxu0 0.0
        %588 = vmatprep.subr.mxu0 0.0
        %589 = vmatpush1.xpose.msra.mxu0 0.0
        %590 = vmatprep.subr.mxu0 0.0
        %591 = vmatpush1.xpose.msra.mxu0 0.0
        %592 = vmatprep.subr.mxu0 0.0
        %593 = vmatpush1.xpose.msra.mxu0 0.0
        %594 = vmatprep.subr.mxu0 0.0
        %595 = vmatpush1.xpose.msra.mxu0 0.0
        %596 = vmatprep.subr.mxu0 0.0
        %597 = vmatpush1.xpose.msra.mxu0 0.0
        %598 = vmatprep.subr.mxu0 0.0
        %599 = vmatpush1.xpose.msra.mxu0 0.0
        %600 = vmatprep.subr.mxu0 0.0
        %601 = vmatpush1.xpose.msra.mxu0 0.0
        %602 = vmatprep.subr.mxu0 0.0
        %603 = vmatpush1.xpose.msra.mxu0 0.0
        %604 = vmatprep.subr.mxu0 0.0
        %605 = vmatpush1.xpose.msra.mxu0 0.0
        %606 = vmatprep.subr.mxu0 0.0
        %607 = vmatpush1.xpose.msra.mxu0 0.0
        %608 = vmatprep.subr.mxu0 0.0
        %609 = vmatpush1.xpose.msra.mxu0 0.0
        %610 = vmatprep.mubr.f32.mxu0 0.0
        %611 = vmatmul.mubr.f32.gmra.mrb[0].mxu0 %v520
        %v612 = vpop.f32.mrb[0].mxu0
        %v613 = vadd.f32 0.0, %v612
        %v614 = vpop.f32.mrb[0].mxu0
        %615 = vdwg.mxu0
        %v616 = vadd.f32 %v509, %v613
        %s617 = scalar_lea.vmem %s172, 432
        %v618 = vld [vmem:[%s617] sm:$0xff]
        %v619 = vld [vmem:[%s617 + $0x10] sm:$0xff]
        %v620 = vld [vmem:[%s617 + $0x20] sm:$0xff]
        %v621 = vld [vmem:[%s617 + $0x30] sm:$0xff]
        %v622 = vld [vmem:[%s617 + $0x40] sm:$0xff]
        %v623 = vld [vmem:[%s617 + $0x50] sm:$0xff]
        %v624 = vld [vmem:[%s617 + $0x60] sm:$0xff]
        %v625 = vld [vmem:[%s617 + $0x70] sm:$0xff]
        %v627 = vsel %vm209, %v182, 0
        %v630 = vsel %vm209, %v618, 0
        %v633 = vsel %vm209, %v619, 0
        %v636 = vsel %vm209, %v620, 0
        %v639 = vsel %vm209, %v621, 0
        %v642 = vsel %vm209, %v622, 0
        %v645 = vsel %vm209, %v623, 0
        %v648 = vsel %vm209, %v624, 0
        %v651 = vsel %vm209, %v625, 0
        %653 = vmatprep.subr.mxu0 0.0
        %654 = vmatpush1.xpose.msra.mxu0 %v630
        %655 = vmatprep.subr.mxu0 0.0
        %656 = vmatpush1.xpose.msra.mxu0 %v633
        %657 = vmatprep.subr.mxu0 0.0
        %658 = vmatpush1.xpose.msra.mxu0 %v636
        %659 = vmatprep.subr.mxu0 0.0
        %660 = vmatpush1.xpose.msra.mxu0 %v639
        %661 = vmatprep.subr.mxu0 0.0
        %662 = vmatpush1.xpose.msra.mxu0 %v642
        %663 = vmatprep.subr.mxu0 0.0
        %664 = vmatpush1.xpose.msra.mxu0 %v645
        %665 = vmatprep.subr.mxu0 0.0
        %666 = vmatpush1.xpose.msra.mxu0 %v648
        %667 = vmatprep.subr.mxu0 0.0
        %668 = vmatpush1.xpose.msra.mxu0 %v651
        %669 = vmatprep.subr.mxu0 0.0
        %670 = vmatpush1.xpose.msra.mxu0 0.0
        %671 = vmatprep.subr.mxu0 0.0
        %672 = vmatpush1.xpose.msra.mxu0 0.0
        %673 = vmatprep.subr.mxu0 0.0
        %674 = vmatpush1.xpose.msra.mxu0 0.0
        %675 = vmatprep.subr.mxu0 0.0
        %676 = vmatpush1.xpose.msra.mxu0 0.0
        %677 = vmatprep.subr.mxu0 0.0
        %678 = vmatpush1.xpose.msra.mxu0 0.0
        %679 = vmatprep.subr.mxu0 0.0
        %680 = vmatpush1.xpose.msra.mxu0 0.0
        %681 = vmatprep.subr.mxu0 0.0
        %682 = vmatpush1.xpose.msra.mxu0 0.0
        %683 = vmatprep.subr.mxu0 0.0
        %684 = vmatpush1.xpose.msra.mxu0 0.0
        %685 = vmatprep.subr.mxu0 0.0
        %686 = vmatpush1.xpose.msra.mxu0 0.0
        %687 = vmatprep.subr.mxu0 0.0
        %688 = vmatpush1.xpose.msra.mxu0 0.0
        %689 = vmatprep.subr.mxu0 0.0
        %690 = vmatpush1.xpose.msra.mxu0 0.0
        %691 = vmatprep.subr.mxu0 0.0
        %692 = vmatpush1.xpose.msra.mxu0 0.0
        %693 = vmatprep.subr.mxu0 0.0
        %694 = vmatpush1.xpose.msra.mxu0 0.0
        %695 = vmatprep.subr.mxu0 0.0
        %696 = vmatpush1.xpose.msra.mxu0 0.0
        %697 = vmatprep.subr.mxu0 0.0
        %698 = vmatpush1.xpose.msra.mxu0 0.0
        %699 = vmatprep.subr.mxu0 0.0
        %700 = vmatpush1.xpose.msra.mxu0 0.0
        %701 = vmatprep.subr.mxu0 0.0
        %702 = vmatpush1.xpose.msra.mxu0 0.0
        %703 = vmatprep.subr.mxu0 0.0
        %704 = vmatpush1.xpose.msra.mxu0 0.0
        %705 = vmatprep.subr.mxu0 0.0
        %706 = vmatpush1.xpose.msra.mxu0 0.0
        %707 = vmatprep.subr.mxu0 0.0
        %708 = vmatpush1.xpose.msra.mxu0 0.0
        %709 = vmatprep.subr.mxu0 0.0
        %710 = vmatpush1.xpose.msra.mxu0 0.0
        %711 = vmatprep.subr.mxu0 0.0
        %712 = vmatpush1.xpose.msra.mxu0 0.0
        %713 = vmatprep.subr.mxu0 0.0
        %714 = vmatpush1.xpose.msra.mxu0 0.0
        %715 = vmatprep.subr.mxu0 0.0
        %716 = vmatpush1.xpose.msra.mxu0 0.0
        %717 = vmatprep.mubr.f32.mxu0 0.0
        %718 = vmatmul.mubr.f32.gmra.mrb[0].mxu0 %v627
        %v719 = vpop.f32.mrb[0].mxu0
        %v720 = vadd.f32 0.0, %v719
        %v721 = vpop.f32.mrb[0].mxu0
        %722 = vdwg.mxu0
        %v723 = vadd.f32 %v616, %v720
        %v724 = vld [vmem:[%s510 + $0x1] sm:$0xff]
        %v725 = vld [vmem:[%s510 + $0x11] sm:$0xff]
        %v726 = vld [vmem:[%s510 + $0x21] sm:$0xff]
        %v727 = vld [vmem:[%s510 + $0x31] sm:$0xff]
        %v728 = vld [vmem:[%s510 + $0x41] sm:$0xff]
        %v729 = vld [vmem:[%s510 + $0x51] sm:$0xff]
        %v730 = vld [vmem:[%s510 + $0x61] sm:$0xff]
        %v731 = vld [vmem:[%s510 + $0x71] sm:$0xff]
        %v733 = vsel %vm209, %v184, 0
        %v736 = vsel %vm209, %v724, 0
        %v739 = vsel %vm209, %v725, 0
        %v742 = vsel %vm209, %v726, 0
        %v745 = vsel %vm209, %v727, 0
        %v748 = vsel %vm209, %v728, 0
        %v751 = vsel %vm209, %v729, 0
        %v754 = vsel %vm209, %v730, 0
        %v757 = vsel %vm209, %v731, 0
        %759 = vmatprep.subr.mxu0 0.0
        %760 = vmatpush1.xpose.msra.mxu0 %v736
        %761 = vmatprep.subr.mxu0 0.0
        %762 = vmatpush1.xpose.msra.mxu0 %v739
        %763 = vmatprep.subr.mxu0 0.0
        %764 = vmatpush1.xpose.msra.mxu0 %v742
        %765 = vmatprep.subr.mxu0 0.0
        %766 = vmatpush1.xpose.msra.mxu0 %v745
        %767 = vmatprep.subr.mxu0 0.0
        %768 = vmatpush1.xpose.msra.mxu0 %v748
        %769 = vmatprep.subr.mxu0 0.0
        %770 = vmatpush1.xpose.msra.mxu0 %v751
        %771 = vmatprep.subr.mxu0 0.0
        %772 = vmatpush1.xpose.msra.mxu0 %v754
        %773 = vmatprep.subr.mxu0 0.0
        %774 = vmatpush1.xpose.msra.mxu0 %v757
        %775 = vmatprep.subr.mxu0 0.0
        %776 = vmatpush1.xpose.msra.mxu0 0.0
        %777 = vmatprep.subr.mxu0 0.0
        %778 = vmatpush1.xpose.msra.mxu0 0.0
        %779 = vmatprep.subr.mxu0 0.0
        %780 = vmatpush1.xpose.msra.mxu0 0.0
        %781 = vmatprep.subr.mxu0 0.0
        %782 = vmatpush1.xpose.msra.mxu0 0.0
        %783 = vmatprep.subr.mxu0 0.0
        %784 = vmatpush1.xpose.msra.mxu0 0.0
        %785 = vmatprep.subr.mxu0 0.0
        %786 = vmatpush1.xpose.msra.mxu0 0.0
        %787 = vmatprep.subr.mxu0 0.0
        %788 = vmatpush1.xpose.msra.mxu0 0.0
        %789 = vmatprep.subr.mxu0 0.0
        %790 = vmatpush1.xpose.msra.mxu0 0.0
        %791 = vmatprep.subr.mxu0 0.0
        %792 = vmatpush1.xpose.msra.mxu0 0.0
        %793 = vmatprep.subr.mxu0 0.0
        %794 = vmatpush1.xpose.msra.mxu0 0.0
        %795 = vmatprep.subr.mxu0 0.0
        %796 = vmatpush1.xpose.msra.mxu0 0.0
        %797 = vmatprep.subr.mxu0 0.0
        %798 = vmatpush1.xpose.msra.mxu0 0.0
        %799 = vmatprep.subr.mxu0 0.0
        %800 = vmatpush1.xpose.msra.mxu0 0.0
        %801 = vmatprep.subr.mxu0 0.0
        %802 = vmatpush1.xpose.msra.mxu0 0.0
        %803 = vmatprep.subr.mxu0 0.0
        %804 = vmatpush1.xpose.msra.mxu0 0.0
        %805 = vmatprep.subr.mxu0 0.0
        %806 = vmatpush1.xpose.msra.mxu0 0.0
        %807 = vmatprep.subr.mxu0 0.0
        %808 = vmatpush1.xpose.msra.mxu0 0.0
        %809 = vmatprep.subr.mxu0 0.0
        %810 = vmatpush1.xpose.msra.mxu0 0.0
        %811 = vmatprep.subr.mxu0 0.0
        %812 = vmatpush1.xpose.msra.mxu0 0.0
        %813 = vmatprep.subr.mxu0 0.0
        %814 = vmatpush1.xpose.msra.mxu0 0.0
        %815 = vmatprep.subr.mxu0 0.0
        %816 = vmatpush1.xpose.msra.mxu0 0.0
        %817 = vmatprep.subr.mxu0 0.0
        %818 = vmatpush1.xpose.msra.mxu0 0.0
        %819 = vmatprep.subr.mxu0 0.0
        %820 = vmatpush1.xpose.msra.mxu0 0.0
        %821 = vmatprep.subr.mxu0 0.0
        %822 = vmatpush1.xpose.msra.mxu0 0.0
        %823 = vmatprep.mubr.f32.mxu0 0.0
        %824 = vmatmul.mubr.f32.gmra.mrb[0].mxu0 %v733
        %v825 = vpop.f32.mrb[0].mxu0
        %v826 = vadd.f32 0.0, %v825
        %v827 = vpop.f32.mrb[0].mxu0
        %828 = vdwg.mxu0
        %v829 = vadd.f32 %v723, %v826
        %s830 = scalar_lea.vmem %s172, 16
        %v831 = vld [vmem:[%s830] sm:$0xff]
        %v832 = vld [vmem:[%s830 + $0x10] sm:$0xff]
        %v833 = vld [vmem:[%s830 + $0x20] sm:$0xff]
        %v834 = vld [vmem:[%s830 + $0x30] sm:$0xff]
        %v835 = vld [vmem:[%s830 + $0x40] sm:$0xff]
        %v836 = vld [vmem:[%s830 + $0x50] sm:$0xff]
        %v837 = vld [vmem:[%s830 + $0x60] sm:$0xff]
        %v838 = vld [vmem:[%s830 + $0x70] sm:$0xff]
        %v840 = vsel %vm209, %v186, 0
        %v843 = vsel %vm209, %v831, 0
        %v846 = vsel %vm209, %v832, 0
        %v849 = vsel %vm209, %v833, 0
        %v852 = vsel %vm209, %v834, 0
        %v855 = vsel %vm209, %v835, 0
        %v858 = vsel %vm209, %v836, 0
        %v861 = vsel %vm209, %v837, 0
        %v864 = vsel %vm209, %v838, 0
        %866 = vmatprep.subr.mxu0 0.0
        %867 = vmatpush1.xpose.msra.mxu0 %v843
        %868 = vmatprep.subr.mxu0 0.0
        %869 = vmatpush1.xpose.msra.mxu0 %v846
        %870 = vmatprep.subr.mxu0 0.0
        %871 = vmatpush1.xpose.msra.mxu0 %v849
        %872 = vmatprep.subr.mxu0 0.0
        %873 = vmatpush1.xpose.msra.mxu0 %v852
        %874 = vmatprep.subr.mxu0 0.0
        %875 = vmatpush1.xpose.msra.mxu0 %v855
        %876 = vmatprep.subr.mxu0 0.0
        %877 = vmatpush1.xpose.msra.mxu0 %v858
        %878 = vmatprep.subr.mxu0 0.0
        %879 = vmatpush1.xpose.msra.mxu0 %v861
        %880 = vmatprep.subr.mxu0 0.0
        %881 = vmatpush1.xpose.msra.mxu0 %v864
        %882 = vmatprep.subr.mxu0 0.0
        %883 = vmatpush1.xpose.msra.mxu0 0.0
        %884 = vmatprep.subr.mxu0 0.0
        %885 = vmatpush1.xpose.msra.mxu0 0.0
        %886 = vmatprep.subr.mxu0 0.0
        %887 = vmatpush1.xpose.msra.mxu0 0.0
        %888 = vmatprep.subr.mxu0 0.0
        %889 = vmatpush1.xpose.msra.mxu0 0.0
        %890 = vmatprep.subr.mxu0 0.0
        %891 = vmatpush1.xpose.msra.mxu0 0.0
        %892 = vmatprep.subr.mxu0 0.0
        %893 = vmatpush1.xpose.msra.mxu0 0.0
        %894 = vmatprep.subr.mxu0 0.0
        %895 = vmatpush1.xpose.msra.mxu0 0.0
        %896 = vmatprep.subr.mxu0 0.0
        %897 = vmatpush1.xpose.msra.mxu0 0.0
        %898 = vmatprep.subr.mxu0 0.0
        %899 = vmatpush1.xpose.msra.mxu0 0.0
        %900 = vmatprep.subr.mxu0 0.0
        %901 = vmatpush1.xpose.msra.mxu0 0.0
        %902 = vmatprep.subr.mxu0 0.0
        %903 = vmatpush1.xpose.msra.mxu0 0.0
        %904 = vmatprep.subr.mxu0 0.0
        %905 = vmatpush1.xpose.msra.mxu0 0.0
        %906 = vmatprep.subr.mxu0 0.0
        %907 = vmatpush1.xpose.msra.mxu0 0.0
        %908 = vmatprep.subr.mxu0 0.0
        %909 = vmatpush1.xpose.msra.mxu0 0.0
        %910 = vmatprep.subr.mxu0 0.0
        %911 = vmatpush1.xpose.msra.mxu0 0.0
        %912 = vmatprep.subr.mxu0 0.0
        %913 = vmatpush1.xpose.msra.mxu0 0.0
        %914 = vmatprep.subr.mxu0 0.0
        %915 = vmatpush1.xpose.msra.mxu0 0.0
        %916 = vmatprep.subr.mxu0 0.0
        %917 = vmatpush1.xpose.msra.mxu0 0.0
        %918 = vmatprep.subr.mxu0 0.0
        %919 = vmatpush1.xpose.msra.mxu0 0.0
        %920 = vmatprep.subr.mxu0 0.0
        %921 = vmatpush1.xpose.msra.mxu0 0.0
        %922 = vmatprep.subr.mxu0 0.0
        %923 = vmatpush1.xpose.msra.mxu0 0.0
        %924 = vmatprep.subr.mxu0 0.0
        %925 = vmatpush1.xpose.msra.mxu0 0.0
        %926 = vmatprep.subr.mxu0 0.0
        %927 = vmatpush1.xpose.msra.mxu0 0.0
        %928 = vmatprep.subr.mxu0 0.0
        %929 = vmatpush1.xpose.msra.mxu0 0.0
        %930 = vmatprep.mubr.f32.mxu0 0.0
        %931 = vmatmul.mubr.f32.gmra.mrb[0].mxu0 %v840
        %v932 = vpop.f32.mrb[0].mxu0
        %v933 = vadd.f32 0.0, %v932
        %v934 = vpop.f32.mrb[0].mxu0
        %935 = vdwg.mxu0
        %v936 = vadd.f32 %v829, %v933
        %s937 = scalar_lea.vmem %s172, 160
        %v938 = vld [vmem:[%s937] sm:$0xff]
        %v939 = vld [vmem:[%s937 + $0x10] sm:$0xff]
        %v940 = vld [vmem:[%s937 + $0x20] sm:$0xff]
        %v941 = vld [vmem:[%s937 + $0x30] sm:$0xff]
        %v942 = vld [vmem:[%s937 + $0x40] sm:$0xff]
        %v943 = vld [vmem:[%s937 + $0x50] sm:$0xff]
        %v944 = vld [vmem:[%s937 + $0x60] sm:$0xff]
        %v945 = vld [vmem:[%s937 + $0x70] sm:$0xff]
        %v947 = vsel %vm209, %v188, 0
        %v950 = vsel %vm209, %v938, 0
        %v953 = vsel %vm209, %v939, 0
        %v956 = vsel %vm209, %v940, 0
        %v959 = vsel %vm209, %v941, 0
        %v962 = vsel %vm209, %v942, 0
        %v965 = vsel %vm209, %v943, 0
        %v968 = vsel %vm209, %v944, 0
        %v971 = vsel %vm209, %v945, 0
        %973 = vmatprep.subr.mxu0 0.0
        %974 = vmatpush1.xpose.msra.mxu0 %v950
        %975 = vmatprep.subr.mxu0 0.0
        %976 = vmatpush1.xpose.msra.mxu0 %v953
        %977 = vmatprep.subr.mxu0 0.0
        %978 = vmatpush1.xpose.msra.mxu0 %v956
        %979 = vmatprep.subr.mxu0 0.0
        %980 = vmatpush1.xpose.msra.mxu0 %v959
        %981 = vmatprep.subr.mxu0 0.0
        %982 = vmatpush1.xpose.msra.mxu0 %v962
        %983 = vmatprep.subr.mxu0 0.0
        %984 = vmatpush1.xpose.msra.mxu0 %v965
        %985 = vmatprep.subr.mxu0 0.0
        %986 = vmatpush1.xpose.msra.mxu0 %v968
        %987 = vmatprep.subr.mxu0 0.0
        %988 = vmatpush1.xpose.msra.mxu0 %v971
        %989 = vmatprep.subr.mxu0 0.0
        %990 = vmatpush1.xpose.msra.mxu0 0.0
        %991 = vmatprep.subr.mxu0 0.0
        %992 = vmatpush1.xpose.msra.mxu0 0.0
        %993 = vmatprep.subr.mxu0 0.0
        %994 = vmatpush1.xpose.msra.mxu0 0.0
        %995 = vmatprep.subr.mxu0 0.0
        %996 = vmatpush1.xpose.msra.mxu0 0.0
        %997 = vmatprep.subr.mxu0 0.0
        %998 = vmatpush1.xpose.msra.mxu0 0.0
        %999 = vmatprep.subr.mxu0 0.0
        %1000 = vmatpush1.xpose.msra.mxu0 0.0
        %1001 = vmatprep.subr.mxu0 0.0
        %1002 = vmatpush1.xpose.msra.mxu0 0.0
        %1003 = vmatprep.subr.mxu0 0.0
        %1004 = vmatpush1.xpose.msra.mxu0 0.0
        %1005 = vmatprep.subr.mxu0 0.0
        %1006 = vmatpush1.xpose.msra.mxu0 0.0
        %1007 = vmatprep.subr.mxu0 0.0
        %1008 = vmatpush1.xpose.msra.mxu0 0.0
        %1009 = vmatprep.subr.mxu0 0.0
        %1010 = vmatpush1.xpose.msra.mxu0 0.0
        %1011 = vmatprep.subr.mxu0 0.0
        %1012 = vmatpush1.xpose.msra.mxu0 0.0
        %1013 = vmatprep.subr.mxu0 0.0
        %1014 = vmatpush1.xpose.msra.mxu0 0.0
        %1015 = vmatprep.subr.mxu0 0.0
        %1016 = vmatpush1.xpose.msra.mxu0 0.0
        %1017 = vmatprep.subr.mxu0 0.0
        %1018 = vmatpush1.xpose.msra.mxu0 0.0
        %1019 = vmatprep.subr.mxu0 0.0
        %1020 = vmatpush1.xpose.msra.mxu0 0.0
        %1021 = vmatprep.subr.mxu0 0.0
        %1022 = vmatpush1.xpose.msra.mxu0 0.0
        %1023 = vmatprep.subr.mxu0 0.0
        %1024 = vmatpush1.xpose.msra.mxu0 0.0
        %1025 = vmatprep.subr.mxu0 0.0
        %1026 = vmatpush1.xpose.msra.mxu0 0.0
        %1027 = vmatprep.subr.mxu0 0.0
        %1028 = vmatpush1.xpose.msra.mxu0 0.0
        %1029 = vmatprep.subr.mxu0 0.0
        %1030 = vmatpush1.xpose.msra.mxu0 0.0
        %1031 = vmatprep.subr.mxu0 0.0
        %1032 = vmatpush1.xpose.msra.mxu0 0.0
        %1033 = vmatprep.subr.mxu0 0.0
        %1034 = vmatpush1.xpose.msra.mxu0 0.0
        %1035 = vmatprep.subr.mxu0 0.0
        %1036 = vmatpush1.xpose.msra.mxu0 0.0
        %1037 = vmatprep.mubr.f32.mxu0 0.0
        %1038 = vmatmul.mubr.f32.gmra.mrb[0].mxu0 %v947
        %v1039 = vpop.f32.mrb[0].mxu0
        %v1040 = vadd.f32 0.0, %v1039
        %v1041 = vpop.f32.mrb[0].mxu0
        %1042 = vdwg.mxu0
        %v1043 = vadd.f32 %v936, %v1040
        %v1044 = vld [vmem:[%s830 + $0x1] sm:$0xff]
        %v1045 = vld [vmem:[%s830 + $0x11] sm:$0xff]
        %v1046 = vld [vmem:[%s830 + $0x21] sm:$0xff]
        %v1047 = vld [vmem:[%s830 + $0x31] sm:$0xff]
        %v1048 = vld [vmem:[%s830 + $0x41] sm:$0xff]
        %v1049 = vld [vmem:[%s830 + $0x51] sm:$0xff]
        %v1050 = vld [vmem:[%s830 + $0x61] sm:$0xff]
        %v1051 = vld [vmem:[%s830 + $0x71] sm:$0xff]
        %v1053 = vsel %vm209, %v190, 0
        %v1056 = vsel %vm209, %v1044, 0
        %v1059 = vsel %vm209, %v1045, 0
        %v1062 = vsel %vm209, %v1046, 0
        %v1065 = vsel %vm209, %v1047, 0
        %v1068 = vsel %vm209, %v1048, 0
        %v1071 = vsel %vm209, %v1049, 0
        %v1074 = vsel %vm209, %v1050, 0
        %v1077 = vsel %vm209, %v1051, 0
        %1079 = vmatprep.subr.mxu0 0.0
        %1080 = vmatpush1.xpose.msra.mxu0 %v1056
        %1081 = vmatprep.subr.mxu0 0.0
        %1082 = vmatpush1.xpose.msra.mxu0 %v1059
        %1083 = vmatprep.subr.mxu0 0.0
        %1084 = vmatpush1.xpose.msra.mxu0 %v1062
        %1085 = vmatprep.subr.mxu0 0.0
        %1086 = vmatpush1.xpose.msra.mxu0 %v1065
        %1087 = vmatprep.subr.mxu0 0.0
        %1088 = vmatpush1.xpose.msra.mxu0 %v1068
        %1089 = vmatprep.subr.mxu0 0.0
        %1090 = vmatpush1.xpose.msra.mxu0 %v1071
        %1091 = vmatprep.subr.mxu0 0.0
        %1092 = vmatpush1.xpose.msra.mxu0 %v1074
        %1093 = vmatprep.subr.mxu0 0.0
        %1094 = vmatpush1.xpose.msra.mxu0 %v1077
        %1095 = vmatprep.subr.mxu0 0.0
        %1096 = vmatpush1.xpose.msra.mxu0 0.0
        %1097 = vmatprep.subr.mxu0 0.0
        %1098 = vmatpush1.xpose.msra.mxu0 0.0
        %1099 = vmatprep.subr.mxu0 0.0
        %1100 = vmatpush1.xpose.msra.mxu0 0.0
        %1101 = vmatprep.subr.mxu0 0.0
        %1102 = vmatpush1.xpose.msra.mxu0 0.0
        %1103 = vmatprep.subr.mxu0 0.0
        %1104 = vmatpush1.xpose.msra.mxu0 0.0
        %1105 = vmatprep.subr.mxu0 0.0
        %1106 = vmatpush1.xpose.msra.mxu0 0.0
        %1107 = vmatprep.subr.mxu0 0.0
        %1108 = vmatpush1.xpose.msra.mxu0 0.0
        %1109 = vmatprep.subr.mxu0 0.0
        %1110 = vmatpush1.xpose.msra.mxu0 0.0
        %1111 = vmatprep.subr.mxu0 0.0
        %1112 = vmatpush1.xpose.msra.mxu0 0.0
        %1113 = vmatprep.subr.mxu0 0.0
        %1114 = vmatpush1.xpose.msra.mxu0 0.0
        %1115 = vmatprep.subr.mxu0 0.0
        %1116 = vmatpush1.xpose.msra.mxu0 0.0
        %1117 = vmatprep.subr.mxu0 0.0
        %1118 = vmatpush1.xpose.msra.mxu0 0.0
        %1119 = vmatprep.subr.mxu0 0.0
        %1120 = vmatpush1.xpose.msra.mxu0 0.0
        %1121 = vmatprep.subr.mxu0 0.0
        %1122 = vmatpush1.xpose.msra.mxu0 0.0
        %1123 = vmatprep.subr.mxu0 0.0
        %1124 = vmatpush1.xpose.msra.mxu0 0.0
        %1125 = vmatprep.subr.mxu0 0.0
        %1126 = vmatpush1.xpose.msra.mxu0 0.0
        %1127 = vmatprep.subr.mxu0 0.0
        %1128 = vmatpush1.xpose.msra.mxu0 0.0
        %1129 = vmatprep.subr.mxu0 0.0
        %1130 = vmatpush1.xpose.msra.mxu0 0.0
        %1131 = vmatprep.subr.mxu0 0.0
        %1132 = vmatpush1.xpose.msra.mxu0 0.0
        %1133 = vmatprep.subr.mxu0 0.0
        %1134 = vmatpush1.xpose.msra.mxu0 0.0
        %1135 = vmatprep.subr.mxu0 0.0
        %1136 = vmatpush1.xpose.msra.mxu0 0.0
        %1137 = vmatprep.subr.mxu0 0.0
        %1138 = vmatpush1.xpose.msra.mxu0 0.0
        %1139 = vmatprep.subr.mxu0 0.0
        %1140 = vmatpush1.xpose.msra.mxu0 0.0
        %1141 = vmatprep.subr.mxu0 0.0
        %1142 = vmatpush1.xpose.msra.mxu0 0.0
        %1143 = vmatprep.mubr.f32.mxu0 0.0
        %1144 = vmatmul.mubr.f32.gmra.mrb[0].mxu0 %v1053
        %v1145 = vpop.f32.mrb[0].mxu0
        %v1146 = vadd.f32 0.0, %v1145
        %v1147 = vpop.f32.mrb[0].mxu0
        %1148 = vdwg.mxu0
        %v1149 = vadd.f32 %v1043, %v1146
        %1151 = vset.pattern.permute.xlu0 0
        %1152 = vperm.xlu0 %1151, %v191
        %v1153 = vpop.permute.xlu0 %1152
        %v1155 = vadd.f32 %v1149, %v1153
        %vm1156 = vcmask 523264
        %1157 = vst.msk [vmem:[%s166] sm:$0xff] %vm1156, %v1155
        %s1158 = sand.u32 %s93, 1
        %s1159 = scalar_lea.sflag [#allocation3], %s1158
        %s1160 = sand.u32 %s93, 1
        %s1161 = smul.addr %s1160, 8
        %s1162 = scalar_lea.vmem [#allocation2], %s1161
        // Predicated region
        $region33: #{tpu_custom_call.1} parent=31 // pred_check
          %p1163 = pneg %p103
        $region34: #{tpu_custom_call.1} parent=31 // pred_check_branch
          %1165 = sbr.rel (%p1163) target = $region36
        $region35: #{tpu_custom_call.1} parent=31 // pred_region
          %s1167 = ssub.s32 128, 128
          %1168 = vsyncadd %s1159, %s1167
          %s1169 = smul.addr %s17, 128
          %s1170 = scalar_lea.hbm %s3, %s1169
          %s1172 = sshll.u32 %s1162, 4
          %s1173 = int_to_ptr.vmem [resolvable:$true] %s1172
          %1175 = dma.vmem_to_hbm [thread:$0]  %s1173, 128, %s1170, %s1159
        $region36: #{tpu_custom_call.1} parent=31 // pred_fallthru
          _
      $region32: #{tpu_custom_call.1} parent=5 // pred_fallthru
        _
      %p1176 = scmp.le.s32.totalorder 2, %s12
      // Predicated region
      $region37: #{tpu_custom_call.1} parent=5 // pred_check
        %p1177 = pneg %p1176
      $region38: #{tpu_custom_call.1} parent=5 // pred_check_branch
        %1179 = sbr.rel (%p1177) target = $region40
      $region39: #{tpu_custom_call.1} parent=5 // pred_region
        %s1180 = ssub.s32 %s12, 2
        // Predicated region
        $region41: #{tpu_custom_call.1} parent=39 // pred_check
          %p1181 = pneg %p109
        $region42: #{tpu_custom_call.1} parent=39 // pred_check_branch
          %1183 = sbr.rel (%p1181) target = $region44
        $region43: #{tpu_custom_call.1} parent=39 // pred_region
          %s1184 = sand.u32 %s94, 1
          %s1185 = scalar_lea.sflag [#allocation3], %s1184
          %s1186 = sand.u32 %s94, 1
          %s1187 = smul.addr %s1186, 8
          %s1188 = scalar_lea.vmem [#allocation2], %s1187
          %1189 = dma.done %s1185, 128
        $region44: #{tpu_custom_call.1} parent=39 // pred_fallthru
          _
      $region40: #{tpu_custom_call.1} parent=5 // pred_fallthru
        _
    $region6: #{tpu_custom_call.1} parent=1 // loop_footer
      %s16 = sadd.s32 1, %s12
    $region7: #{tpu_custom_call.1} parent=1 // loop_footer_branch
      %11 = sbr.rel target = $region3
    $region8: #{tpu_custom_call.1} parent=1 // loop_exit
      _
    %1190 = vsyncpa [#allocation3], 1
    %s1191 = scalar_lea.sflag [#allocation3], 1
    %1192 = vsyncpa %s1191, 1

</llo_original>
